<compile_context>
chip_gen: v7x
topology: tpu7x:2x2x1
jax: 0.10.0
libtpu: 0.0.40
codegen_flags: <defaults>
</compile_context>

<pallas_src>
import functools

import jax
import jax.numpy as jnp
import numpy as np
from jax import lax
from jax.experimental import pallas as pl
from jax.experimental.pallas import tpu as pltpu

# Deterministic "module parameters" (loss weights from __init__).
LOSS_WEIGHTS = (0.7, 0.3)   # (MSE weight, L1 weight)
_LANES = 128


def _composite_partials_kernel(pred_ref, tgt_ref, out_ref, *,
                               tile_m, m_rows, num_full_tiles, need_mask):
    i = pl.program_id(0)

    # Upcast is a no-op at trace time for f32 inputs; real convert only for bf16.
    diff = pred_ref[...].astype(jnp.float32) - tgt_ref[...].astype(jnp.float32)

    def write_partials(d):
        sq = jnp.sum(d * d, axis=0, keepdims=True)        # (1, 128)
        ab = jnp.sum(jnp.abs(d), axis=0, keepdims=True)   # (1, 128)
        # Single combined (2, 128) store instead of two masked sublane stores
        # (store slot is the narrowest VLIW slot on v5e).
        out_ref[0, :, :] = jnp.concatenate([sq, ab], axis=0)

    if need_mask:
        # Full tiles: no mask work at all in the hot path.
        @pl.when(i < num_full_tiles)
        def _():
            write_partials(diff)

        # Tail tile only: zero the out-of-bounds rows BEFORE squaring/abs so
        # garbage (NaN/Inf) in padded rows cannot propagate.
        @pl.when(i >= num_full_tiles)
        def _():
            rows = i * tile_m + lax.broadcasted_iota(jnp.int32, diff.shape, 0)
            write_partials(jnp.where(rows < m_rows, diff, 0.0))
    else:
        write_partials(diff)


def _vmem_budget():
    """Per-generation (target_block_bytes, vmem_limit_cap)."""
    try:
        cap = int(pltpu.get_tpu_info().vmem_capacity_bytes)
    except Exception:
        cap = 64 << 20            # conservative: assume v7x-class (64 MiB / TC)
    if cap >= (100 << 20):        # v5e / v6e: 128 MiB per TensorCore
        return 16 << 20, 96 << 20
    else:                         # v7x: 64 MiB per TensorCore
        return 8 << 20, 52 << 20


def _pick_tile_rows(m, itemsize, target_block_bytes):
    """Rows of the (rows, 128) input block: as big as the per-generation budget
    allows, rounded to the dtype's native sublane multiple, and never bigger
    than the (sublane-rounded) problem size — even for tiny M."""
    sublane = 8 * max(1, 4 // max(1, itemsize))   # 8 (f32), 16 (bf16), 32 (int8)
    rows = target_block_bytes // (_LANES * itemsize)
    rows = max((rows // sublane) * sublane, sublane)
    m_rounded = ((m + sublane - 1) // sublane) * sublane
    return max(min(rows, m_rounded), sublane)


def composite_loss(pred, tgt, weights=LOSS_WEIGHTS, *, tile_m=None):
    """Weighted MSE + L1 composite loss; heavy reduction done on-chip."""
    assert pred.shape == tgt.shape
    n_elems = int(np.prod(pred.shape))
    assert n_elems > 0

    flat_p = pred.reshape(-1)
    flat_t = tgt.reshape(-1)
    m = n_elems // _LANES                      # lane-dense rows
    rem = n_elems - m * _LANES                 # < 128 leftover elements

    sum_sq = jnp.float32(0.0)
    sum_ab = jnp.float32(0.0)

    if m > 0:
        p2 = flat_p[: m * _LANES].reshape(m, _LANES)
        t2 = flat_t[: m * _LANES].reshape(m, _LANES)
        itemsize = jnp.dtype(pred.dtype).itemsize
        target_block_bytes, vmem_limit_cap = _vmem_budget()
        if tile_m is None:
            tile_m = _pick_tile_rows(m, itemsize, target_block_bytes)

        num_tiles = pl.cdiv(m, tile_m)
        num_full_tiles = m // tile_m
        need_mask = (m % tile_m) != 0

        kernel = functools.partial(
            _composite_partials_kernel,
            tile_m=tile_m, m_rows=m,
            num_full_tiles=num_full_tiles, need_mask=need_mask)

        # 2 inputs x 2 pipeline buffers + double-buffered (1,2,128) output + slack.
        block_bytes = tile_m * _LANES * itemsize
        vmem_bytes = 4 * block_bytes + 4 * 2 * _LANES * 4 + (8 << 20)
        vmem_bytes = int(min(max(vmem_bytes, 16 << 20), vmem_limit_cap))

        partials = pl.pallas_call(
            kernel,
            out_shape=jax.ShapeDtypeStruct((num_tiles, 2, _LANES), jnp.float32),
            grid_spec=pltpu.PrefetchScalarGridSpec(
                num_scalar_prefetch=0,
                grid=(num_tiles,),
                in_specs=[
                    pl.BlockSpec((tile_m, _LANES), lambda i: (i, 0)),
                    pl.BlockSpec((tile_m, _LANES), lambda i: (i, 0)),
                ],
                # Each grid step owns its own output block -> no shared
                # accumulator, so the axis can be "parallel".
                out_specs=pl.BlockSpec((1, 2, _LANES), lambda i: (i, 0, 0)),
            ),
            compiler_params=pltpu.CompilerParams(
                dimension_semantics=("parallel",),
                vmem_limit_bytes=vmem_bytes,
            ),
        )(p2, t2)

        sums = jnp.sum(partials, axis=(0, 2))   # [sum of squares, sum of abs]
        sum_sq = sum_sq + sums[0]
        sum_ab = sum_ab + sums[1]

    if rem:
        # Host-side (plain jnp) tail for the last < 128 elements.
        dt = (flat_p[m * _LANES:].astype(jnp.float32)
              - flat_t[m * _LANES:].astype(jnp.float32))
        sum_sq = sum_sq + jnp.sum(dt * dt)
        sum_ab = sum_ab + jnp.sum(jnp.abs(dt))

    mse = sum_sq / n_elems
    mae = sum_ab / n_elems
    return jnp.float32(weights[0]) * mse + jnp.float32(weights[1]) * mae


def composite_loss_forward(inputs, weights=LOSS_WEIGHTS, output_prefix=None):
    """Mirrors CompositeLoss.forward: returns the total loss and optionally
    writes the python scalar into the inputs dict under `output_prefix`."""
    total = composite_loss(inputs["predictions"], inputs["targets"], weights)
    if output_prefix is not None:
        inputs[output_prefix] = float(jax.device_get(total))   # .cpu().item() analogue
    return total


def _reference(pred, tgt, weights=LOSS_WEIGHTS):
    diff = pred.astype(jnp.float32) - tgt.astype(jnp.float32)
    mse = jnp.mean(diff * diff)
    mae = jnp.mean(jnp.abs(diff))
    return weights[0] * mse + weights[1] * mae


if __name__ == "__main__":
    key = jax.random.PRNGKey(0)
    k1, k2, k3, k4, k5, k6 = jax.random.split(key, 6)

    # Case 1: D not a multiple of 128 and M not tile-aligned
    #         -> lane-dense reshape + masked tail path.
    N1, D1 = 20, 96
    pred1 = jax.random.normal(k1, (N1, D1), dtype=jnp.float32)
    tgt1 = jax.random.normal(k2, (N1, D1), dtype=jnp.float32)
    inputs = {"predictions": pred1, "targets": tgt1}
    total1 = jax.block_until_ready(
        composite_loss_forward(inputs, output_prefix="composite_loss"))
    ref1 = jax.block_until_ready(_reference(pred1, tgt1))
    np.testing.assert_allclose(np.asarray(total1), np.asarray(ref1), rtol=1e-5, atol=1e-5)
    assert "composite_loss" in inputs

    # Case 2: D = 128 and M divisible by the sublane -> unmasked hot path.
    N2, D2 = 32, 128
    pred2 = jax.random.normal(k3, (N2, D2), dtype=jnp.float32)
    tgt2 = jax.random.normal(k4, (N2, D2), dtype=jnp.float32)
    total2 = jax.block_until_ready(composite_loss(pred2, tgt2))
    ref2 = jax.block_until_ready(_reference(pred2, tgt2))
    np.testing.assert_allclose(np.asarray(total2), np.asarray(ref2), rtol=1e-5, atol=1e-5)

    # Case 3: total elements not a multiple of 128 -> host-side remainder.
    N3, D3 = 7, 33
    pred3 = jax.random.normal(k5, (N3, D3), dtype=jnp.float32)
    tgt3 = jax.random.normal(k6, (N3, D3), dtype=jnp.float32)
    total3 = jax.block_until_ready(composite_loss(pred3, tgt3))
    ref3 = jax.block_until_ready(_reference(pred3, tgt3))
    np.testing.assert_allclose(np.asarray(total3), np.asarray(ref3), rtol=1e-5, atol=1e-5)

    # TODO(synk): the config-driven sub-loss registry (MetaParent /
    # create_from_config) has no Pallas equivalent; this concretizes the
    # composite as weighted MSE + L1.
    print("KERNEL_OK")
</pallas_src>

<mosaic_0001>
module attributes {stable_mosaic.version = 11 : i64} {
  func.func @_composite_partials_kernel(%arg0: i32, %arg1: memref<16x128xf32, #tpu.memory_space<vmem>>, %arg2: memref<16x128xf32, #tpu.memory_space<vmem>>, %arg3: memref<1x2x128xf32, #tpu.memory_space<vmem>>) attributes {dimension_semantics = [#tpu.dimension_semantics<parallel>], iteration_bounds = array<i64: 1>, scalar_prefetch = 0 : i64, scratch_operands = 0 : i64, tpu.core_type = #tpu.core_type<tc>, window_params = [{transform_indices = @transform_0, window_bounds = array<i64: 16, 128>}, {transform_indices = @transform_1, window_bounds = array<i64: 16, 128>}, {transform_indices = @transform_2, window_bounds = array<i64: 1, 2, 128>}]} {
    %c0 = arith.constant 0 : index
    %c0_0 = arith.constant 0 : index
    %0 = vector.load %arg1[%c0, %c0_0] : memref<16x128xf32, #tpu.memory_space<vmem>>, vector<16x128xf32>
    %c0_1 = arith.constant 0 : index
    %c0_2 = arith.constant 0 : index
    %1 = vector.load %arg2[%c0_1, %c0_2] : memref<16x128xf32, #tpu.memory_space<vmem>>, vector<16x128xf32>
    %2 = arith.subf %0, %1 : vector<16x128xf32>
    %c0_i32 = arith.constant 0 : i32
    %3 = arith.cmpi slt, %arg0, %c0_i32 : i32
    %4 = arith.extui %3 : i1 to i32
    %c0_i32_3 = arith.constant 0 : i32
    %5 = arith.cmpi ne, %4, %c0_i32_3 : i32
    scf.if %5 {
      %9 = arith.mulf %2, %2 : vector<16x128xf32>
      %cst = arith.constant dense<0.000000e+00> : vector<128xf32>
      %10 = vector.multi_reduction <add>, %9, %cst [0] : vector<16x128xf32> to vector<128xf32>
      %11 = vector.shape_cast %10 : vector<128xf32> to vector<1x128xf32>
      %12 = math.absf %2 : vector<16x128xf32>
      %cst_6 = arith.constant dense<0.000000e+00> : vector<128xf32>
      %13 = vector.multi_reduction <add>, %12, %cst_6 [0] : vector<16x128xf32> to vector<128xf32>
      %14 = vector.shape_cast %13 : vector<128xf32> to vector<1x128xf32>
      %15 = tpu.concatenate %11, %14 in 0 : vector<1x128xf32>, vector<1x128xf32> -> vector<2x128xf32>
      %c0_7 = arith.constant 0 : index
      %c0_8 = arith.constant 0 : index
      %c0_9 = arith.constant 0 : index
      %16 = vector.load %arg3[%c0_7, %c0_8, %c0_9] : memref<1x2x128xf32, #tpu.memory_space<vmem>>, vector<1x2x128xf32>
      %17 = vector.shape_cast %16 : vector<1x2x128xf32> to vector<2x128xf32>
      %18 = vector.shape_cast %15 : vector<2x128xf32> to vector<1x2x128xf32>
      tpu.vector_store %arg3[%c0_7, %c0_8, %c0_9], %18 {strides = array<i32>} : memref<1x2x128xf32, #tpu.memory_space<vmem>>, vector<1x2x128xf32>,
    } else {
    }
    %c0_i32_4 = arith.constant 0 : i32
    %6 = arith.cmpi sge, %arg0, %c0_i32_4 : i32
    %7 = arith.extui %6 : i1 to i32
    %c0_i32_5 = arith.constant 0 : i32
    %8 = arith.cmpi ne, %7, %c0_i32_5 : i32
    scf.if %8 {
      %c16_i32 = arith.constant 16 : i32
      %9 = arith.muli %arg0, %c16_i32 : i32
      %10 = tpu.iota {dimensions = array<i32: 0>} : vector<16x128xi32>
      %11 = vector.broadcast %9 : i32 to vector<16x128xi32>
      %12 = arith.addi %11, %10 : vector<16x128xi32>
      %c15_i32 = arith.constant 15 : i32
      %13 = vector.broadcast %c15_i32 : i32 to vector<16x128xi32>
      %14 = arith.cmpi slt, %12, %13 : vector<16x128xi32>
      %cst = arith.constant 0.000000e+00 : f32
      %15 = vector.broadcast %cst : f32 to vector<16x128xf32>
      %16 = arith.select %14, %2, %15 : vector<16x128xi1>, vector<16x128xf32>
      %17 = arith.mulf %16, %16 : vector<16x128xf32>
      %cst_6 = arith.constant dense<0.000000e+00> : vector<128xf32>
      %18 = vector.multi_reduction <add>, %17, %cst_6 [0] : vector<16x128xf32> to vector<128xf32>
      %19 = vector.shape_cast %18 : vector<128xf32> to vector<1x128xf32>
      %20 = math.absf %16 : vector<16x128xf32>
      %cst_7 = arith.constant dense<0.000000e+00> : vector<128xf32>
      %21 = vector.multi_reduction <add>, %20, %cst_7 [0] : vector<16x128xf32> to vector<128xf32>
      %22 = vector.shape_cast %21 : vector<128xf32> to vector<1x128xf32>
      %23 = tpu.concatenate %19, %22 in 0 : vector<1x128xf32>, vector<1x128xf32> -> vector<2x128xf32>
      %c0_8 = arith.constant 0 : index
      %c0_9 = arith.constant 0 : index
      %c0_10 = arith.constant 0 : index
      %24 = vector.load %arg3[%c0_8, %c0_9, %c0_10] : memref<1x2x128xf32, #tpu.memory_space<vmem>>, vector<1x2x128xf32>
      %25 = vector.shape_cast %24 : vector<1x2x128xf32> to vector<2x128xf32>
      %26 = vector.shape_cast %23 : vector<2x128xf32> to vector<1x2x128xf32>
      tpu.vector_store %arg3[%c0_8, %c0_9, %c0_10], %26 {strides = array<i32>} : memref<1x2x128xf32, #tpu.memory_space<vmem>>, vector<1x2x128xf32>,
    } else {
    }
    return
  }
  func.func @transform_0(%arg0: i32) -> (i32, i32) {
    %c0_i32 = arith.constant 0 : i32
    %c0_i32_0 = arith.constant 0 : i32
    return %arg0, %c0_i32 : i32, i32
  }
  func.func @transform_1(%arg0: i32) -> (i32, i32) {
    %c0_i32 = arith.constant 0 : i32
    %c0_i32_0 = arith.constant 0 : i32
    return %arg0, %c0_i32 : i32, i32
  }
  func.func @transform_2(%arg0: i32) -> (i32, i32, i32) {
    %c0_i32 = arith.constant 0 : i32
    %c0_i32_0 = arith.constant 0 : i32
    %c0_i32_1 = arith.constant 0 : i32
    return %arg0, %c0_i32, %c0_i32_0 : i32, i32, i32
  }
}

</mosaic_0001>

<llo_original>
// kernel: tpu_custom_call.1
$region0: #{tpu_custom_call.1}
  #allocation0 [shape = 'u32[]', space=smem, size = 0x4, offset = 0x4, fixed_abs, tag = 'smem constant byte address 0x4 - core index']
  #allocation1 [shape = 'u32[144,128]{1,0:T(1,128)}', space=vmem, size = 0x12000, scoped, tag = 'internal scratch']
  %s0 = inlined_call_operand.hbm [shape: f32[15,128], index: 0, kind: input, shape index: {}]
  %s1 = inlined_call_operand.hbm [shape: f32[15,128], index: 1, kind: input, shape index: {}]
  %s2 = inlined_call_operand.hbm [shape: f32[1,2,128], index: 2, kind: output, shape index: {}]
  %s3 = sld [smem:[#allocation0]]
  $region34: #{tpu_custom_call.1} parent=0
    _
  %s5 = ssub.s32 1, %s3
  %s6 = scalar_select 0, %s5, %s3
  $region1: #{tpu_custom_call.1} parent=0
    #allocation2 [shape = 'u8[8192]{0}', space=vmem, size = 0x2000, scoped, tag = 'input window, operand 0, single buffered']
    #allocation3 [shape = 's32[1]{0}', space=sflag, size = 0x4, scoped, tag = 'scoped memory for tpu_custom_call.1']
    #allocation4 [shape = 's32[1]{0}', space=sflag, size = 0x4, scoped, tag = 'scoped memory for tpu_custom_call.1']
    #allocation5 [shape = 'u8[8192]{0}', space=vmem, size = 0x2000, scoped, tag = 'input window, operand 1, single buffered']
    #allocation6 [shape = 's32[1]{0}', space=sflag, size = 0x4, scoped, tag = 'scoped memory for tpu_custom_call.1']
    #allocation7 [shape = 'u8[1024]{0}', space=vmem, size = 0x400, scoped, tag = 'output window, operand 0, single buffered']
    %7 = vsyncpa [#allocation3], 0
    %8 = vsyncpa [#allocation6], 0
    %9 = vsyncpa [#allocation4], 0
    // Predicated region
    $region2: #{tpu_custom_call.1} parent=1 // pred_check
      _
    $region3: #{tpu_custom_call.1} parent=1 // pred_check_branch
      %11 = sbr.rel (0) target = $region5
    $region4: #{tpu_custom_call.1} parent=1 // pred_region
      %s13 = ssub.s32 256, 256
      %14 = vsyncadd [#allocation3], %s13
      %s15 = sshll.u32 [#allocation2], 4
      %s16 = int_to_ptr.vmem [resolvable:$true] %s15
      %21 = dma.hbm_to_vmem [thread:$0]  %s0, 256, %s16, [#allocation3], 128, 128, 8
    $region5: #{tpu_custom_call.1} parent=1 // pred_fallthru
      _
    // Predicated region
    $region6: #{tpu_custom_call.1} parent=1 // pred_check
      _
    $region7: #{tpu_custom_call.1} parent=1 // pred_check_branch
      %23 = sbr.rel (0) target = $region9
    $region8: #{tpu_custom_call.1} parent=1 // pred_region
      %s25 = ssub.s32 256, 256
      %26 = vsyncadd [#allocation6], %s25
      %s27 = sshll.u32 [#allocation5], 4
      %s28 = int_to_ptr.vmem [resolvable:$true] %s27
      %33 = dma.hbm_to_vmem [thread:$0]  %s1, 256, %s28, [#allocation6], 128, 128, 8
    $region9: #{tpu_custom_call.1} parent=1 // pred_fallthru
      _
    // Predicated region
    $region10: #{tpu_custom_call.1} parent=1 // pred_check
      _
    $region11: #{tpu_custom_call.1} parent=1 // pred_check_branch
      %35 = sbr.rel (0) target = $region13
    $region12: #{tpu_custom_call.1} parent=1 // pred_region
      %36 = dma.done [#allocation3], 256
    $region13: #{tpu_custom_call.1} parent=1 // pred_fallthru
      _
    // Predicated region
    $region14: #{tpu_custom_call.1} parent=1 // pred_check
      _
    $region15: #{tpu_custom_call.1} parent=1 // pred_check_branch
      %38 = sbr.rel (0) target = $region17
    $region16: #{tpu_custom_call.1} parent=1 // pred_region
      %39 = dma.done [#allocation6], 256
    $region17: #{tpu_custom_call.1} parent=1 // pred_fallthru
      _
    %v40 = vld [vmem:[#allocation2] sm:$0xff]
    %v41 = vld [vmem:[#allocation2 + $0x8] sm:$0xff]
    %v42 = vld [vmem:[#allocation5] sm:$0xff]
    %v43 = vld [vmem:[#allocation5 + $0x8] sm:$0xff]
    %v44 = vsub.f32 %v40, %v42
    %v45 = vsub.f32 %v41, %v43
    %p46 = scmp.lt.s32.totalorder 0, 0
    // Predicated region
    $region18: #{tpu_custom_call.1} parent=1 // pred_check
      %p47 = pneg %p46
    $region19: #{tpu_custom_call.1} parent=1 // pred_check_branch
      %49 = sbr.rel (%p47) target = $region21
    $region20: #{tpu_custom_call.1} parent=1 // pred_region
      %v50 = vmul.f32 %v44, %v44
      %v51 = vmul.f32 %v45, %v45
      %v52 = vadd.f32 %v50, %v51
      %v53 = vrot.slane %v52, 4
      %v54 = vadd.f32 %v52, %v53
      %v55 = vrot.slane %v54, 2
      %v56 = vadd.f32 %v54, %v55
      %v57 = vrot.slane %v56, 1
      %v58 = vadd.f32 %v56, %v57
      %v59 = vand.u32 2147483647, %v44
      %v60 = vand.u32 2147483647, %v45
      %v61 = vadd.f32 %v59, %v60
      %v62 = vrot.slane %v61, 4
      %v63 = vadd.f32 %v61, %v62
      %v64 = vrot.slane %v63, 2
      %v65 = vadd.f32 %v63, %v64
      %v66 = vrot.slane %v65, 1
      %v67 = vadd.f32 %v65, %v66
      %vm68 = vcmask 1040384
      %v69 = vsel %vm68, %v58, %v67
      %70 = vst [vmem:[#allocation7] sm:$0x3] %v69
    $region21: #{tpu_custom_call.1} parent=1 // pred_fallthru
      _
    %p71 = scmp.ge.s32.totalorder 0, 0
    // Predicated region
    $region22: #{tpu_custom_call.1} parent=1 // pred_check
      %p72 = pneg %p71
    $region23: #{tpu_custom_call.1} parent=1 // pred_check_branch
      %74 = sbr.rel (%p72) target = $region25
    $region24: #{tpu_custom_call.1} parent=1 // pred_region
      %s75 = smul.u32 0, 16
      %v76 = vlaneseq
      %v77 = vshrl.u32 %v76, 7
      %v78 = vadd.s32 %v77, 8
      %v79 = vstv %s75
      %v80 = vadd.s32 %v79, %v77
      %v81 = vadd.s32 %v79, %v78
      %vm82 = vcmp.lt.s32.totalorder %v80, 15
      %vm83 = vcmp.lt.s32.totalorder %v81, 15
      %v84 = vsel %vm82, %v44, 0.0
      %v85 = vsel %vm83, %v45, 0.0
      %v86 = vmul.f32 %v84, %v84
      %v87 = vmul.f32 %v85, %v85
      %v88 = vadd.f32 %v86, %v87
      %v89 = vrot.slane %v88, 4
      %v90 = vadd.f32 %v88, %v89
      %v91 = vrot.slane %v90, 2
      %v92 = vadd.f32 %v90, %v91
      %v93 = vrot.slane %v92, 1
      %v94 = vadd.f32 %v92, %v93
      %v95 = vand.u32 2147483647, %v84
      %v96 = vand.u32 2147483647, %v85
      %v97 = vadd.f32 %v95, %v96
      %v98 = vrot.slane %v97, 4
      %v99 = vadd.f32 %v97, %v98
      %v100 = vrot.slane %v99, 2
      %v101 = vadd.f32 %v99, %v100
      %v102 = vrot.slane %v101, 1
      %v103 = vadd.f32 %v101, %v102
      %vm104 = vcmask 1040384
      %v105 = vsel %vm104, %v94, %v103
      %106 = vst [vmem:[#allocation7] sm:$0x3] %v105
    $region25: #{tpu_custom_call.1} parent=1 // pred_fallthru
      _
    // Predicated region
    $region26: #{tpu_custom_call.1} parent=1 // pred_check
      _
    $region27: #{tpu_custom_call.1} parent=1 // pred_check_branch
      %108 = sbr.rel (0) target = $region29
    $region28: #{tpu_custom_call.1} parent=1 // pred_region
      %s110 = ssub.s32 32, 32
      %111 = vsyncadd [#allocation4], %s110
      %s113 = sshll.u32 [#allocation7], 4
      %s114 = int_to_ptr.vmem [resolvable:$true] %s113
      %116 = dma.vmem_to_hbm [thread:$0]  %s114, 32, %s2, [#allocation4]
    $region29: #{tpu_custom_call.1} parent=1 // pred_fallthru
      _
    // Predicated region
    $region30: #{tpu_custom_call.1} parent=1 // pred_check
      _
    $region31: #{tpu_custom_call.1} parent=1 // pred_check_branch
      %118 = sbr.rel (0) target = $region33
    $region32: #{tpu_custom_call.1} parent=1 // pred_region
      %119 = dma.done [#allocation4], 32
    $region33: #{tpu_custom_call.1} parent=1 // pred_fallthru
      _
    %120 = vsyncpa [#allocation3], 1
    %121 = vsyncpa [#allocation6], 1
    %122 = vsyncpa [#allocation4], 1

</llo_original>
